<compile_context>
chip_gen: v7x
topology: tpu7x:2x2x1
jax: 0.10.0
libtpu: 0.0.40
codegen_flags: <defaults>
</compile_context>

<pallas_src>
import jax
import jax.numpy as jnp
from jax import lax
from jax.experimental import pallas as pl
from jax.experimental.pallas import tpu as pltpu

_P = 0.5            # F.dropout default probability
_LANE = 128         # vreg lane width
_BLOCK_ROWS = 2048  # 2048 x 128 f32 tile = 1 MiB -> 4 MiB total footprint


def _ceil_div(a, b):
    return -(-a // b)


def _srl(v, amount):
    """Logical right shift on int32 values."""
    return lax.shift_right_logical(v, jnp.int32(amount))


def _dropout_kernel(seed_ref, x_ref, o_ref):
    block_rows, lanes = x_ref.shape
    i = pl.program_id(0)

    # Global flat element index of every element in this tile (int32).
    row_ids = lax.broadcasted_iota(jnp.int32, (block_rows, lanes), 0)
    lane_ids = lax.broadcasted_iota(jnp.int32, (block_rows, lanes), 1)
    idx = (i * block_rows + row_ids) * lanes + lane_ids

    # Counter-based PRNG: murmur3 fmix32 of (index + seed) * golden-ratio.
    # Constants are the signed-int32 encodings of the usual uint32 constants
    # (0x9E3779B9, 0x85EBCA6B, 0xC2B2AE35); int32 multiply wraps identically.
    h = (idx + seed_ref[0]) * jnp.int32(-1640531527)
    h = h ^ _srl(h, 16)
    h = h * jnp.int32(-2048144789)
    h = h ^ _srl(h, 13)
    h = h * jnp.int32(-1028477387)
    h = h ^ _srl(h, 16)

    # p = 0.5: keep iff the (uniformly random) top bit is clear.
    keep = h >= 0

    x = x_ref[...]
    scale = jnp.asarray(1.0 / (1.0 - _P), dtype=x.dtype)  # == 2.0
    o_ref[...] = jnp.where(keep, x * scale, jnp.zeros_like(x))


@jax.jit
def dropout_pallas(x, seed=0):
    """F.dropout(x, p=0.5, training=True) as a tiled Pallas TPU kernel."""
    orig_shape = x.shape
    dtype = x.dtype
    flat = x.reshape(-1)
    n = flat.shape[0]

    # Choose a lane-dense (block_rows, 128) tiling.  Small inputs -> a single
    # block (rows rounded up to a multiple of 8); large inputs -> 2048-row
    # (1 MiB) blocks, double-buffered by the Pallas pipeline.
    rows_needed = max(1, _ceil_div(n, _LANE))
    if rows_needed <= _BLOCK_ROWS:
        block_rows = _ceil_div(rows_needed, 8) * 8
        rows = block_rows
    else:
        block_rows = _BLOCK_ROWS
        rows = _ceil_div(rows_needed, block_rows) * block_rows

    padded = rows * _LANE
    if padded != n:
        # Lane-aligned large inputs skip this pad entirely; only the ragged
        # tail of small/odd sizes is zero-padded and sliced off below.
        flat = jnp.pad(flat, (0, padded - n))
    slab = flat.reshape(rows, _LANE)

    seed_arr = jnp.asarray([seed], dtype=jnp.int32)

    out = pl.pallas_call(
        _dropout_kernel,
        out_shape=jax.ShapeDtypeStruct((rows, _LANE), dtype),
        grid=(rows // block_rows,),
        in_specs=[
            pl.BlockSpec(memory_space=pltpu.MemorySpace.SMEM),     # seed scalar
            pl.BlockSpec((block_rows, _LANE), lambda i: (i, 0)),   # x tile
        ],
        out_specs=pl.BlockSpec((block_rows, _LANE), lambda i: (i, 0)),
        compiler_params=pltpu.CompilerParams(
            dimension_semantics=("parallel",)),
    )(seed_arr, slab)

    out_flat = out.reshape(-1)
    if padded != n:
        out_flat = out_flat[:n]
    return out_flat.reshape(orig_shape)


class Model:
    """JAX/Pallas port of the reference torch Model (no parameters)."""

    def __call__(self, x, seed=0):
        # x_drop = F.dropout(input); the subsequent list-style ops
        # (x.append / x.pop / del x[0]) and the data-dependent `if y:` branch
        # do not affect the returned value, so only the final
        # F.dropout(input) is computed.
        # TODO(synk): list-mutation ops on a tensor have no tensor semantics
        # and are not reproduced.
        return dropout_pallas(x, seed)


if __name__ == "__main__":
    key = jax.random.PRNGKey(0)
    model = Model()

    # Matches `input = torch.randn(1)` from the module definition.
    x = jax.random.normal(key, (1,), dtype=jnp.float32)
    y = model(x, seed=0)
    jax.block_until_ready(y)
    # Each output element must be 0 or 2 * input element.
    assert bool(jnp.all((y == 0) | jnp.isclose(y, 2.0 * x))), \
        "dropout output must be 0 or 2*x elementwise"

    # Also exercise the tiled / gridded (multi-block) path.
    x_big = jax.random.normal(jax.random.PRNGKey(1), (1024, 512),
                              dtype=jnp.float32)
    y_big = model(x_big, seed=7)
    jax.block_until_ready(y_big)
    ok_values = jnp.all((y_big == 0) | jnp.isclose(y_big, 2.0 * x_big))
    keep_frac = jnp.mean((y_big != 0).astype(jnp.float32))
    assert bool(ok_values), "dropout output must be 0 or 2*x elementwise"
    assert 0.45 < float(keep_frac) < 0.55, \
        f"keep fraction {float(keep_frac):.3f} far from 0.5"

    print("KERNEL_OK")
</pallas_src>

<mosaic_0001>
module attributes {stable_mosaic.version = 11 : i64} {
  func.func @_dropout_kernel(%arg0: i32, %arg1: memref<1xi32, #tpu.memory_space<smem>>, %arg2: memref<8x128xf32, #tpu.memory_space<vmem>>, %arg3: memref<8x128xf32, #tpu.memory_space<vmem>>) attributes {dimension_semantics = [#tpu.dimension_semantics<parallel>], iteration_bounds = array<i64: 1>, scalar_prefetch = 0 : i64, scratch_operands = 0 : i64, tpu.core_type = #tpu.core_type<tc>, window_params = [{transform_indices = @transform_0, window_bounds = array<i64: 1>}, {transform_indices = @transform_1, window_bounds = array<i64: 8, 128>}, {transform_indices = @transform_2, window_bounds = array<i64: 8, 128>}]} {
    %0 = tpu.iota {dimensions = array<i32: 0>} : vector<8x128xi32>
    %1 = tpu.iota {dimensions = array<i32: 1>} : vector<8x128xi32>
    %c8_i32 = arith.constant 8 : i32
    %2 = arith.muli %arg0, %c8_i32 : i32
    %3 = vector.broadcast %2 : i32 to vector<8x128xi32>
    %4 = arith.addi %3, %0 : vector<8x128xi32>
    %c128_i32 = arith.constant 128 : i32
    %5 = vector.broadcast %c128_i32 : i32 to vector<8x128xi32>
    %6 = arith.muli %4, %5 : vector<8x128xi32>
    %7 = arith.addi %6, %1 : vector<8x128xi32>
    %c0 = arith.constant 0 : index
    %8 = memref.load %arg1[%c0] : memref<1xi32, #tpu.memory_space<smem>>
    %9 = vector.broadcast %8 : i32 to vector<8x128xi32>
    %10 = arith.addi %7, %9 : vector<8x128xi32>
    %c-1640531527_i32 = arith.constant -1640531527 : i32
    %11 = vector.broadcast %c-1640531527_i32 : i32 to vector<8x128xi32>
    %12 = arith.muli %10, %11 : vector<8x128xi32>
    %c16_i32 = arith.constant 16 : i32
    %13 = vector.broadcast %c16_i32 : i32 to vector<8x128xi32>
    %14 = arith.shrui %12, %13 : vector<8x128xi32>
    %15 = arith.xori %12, %14 : vector<8x128xi32>
    %c-2048144789_i32 = arith.constant -2048144789 : i32
    %16 = vector.broadcast %c-2048144789_i32 : i32 to vector<8x128xi32>
    %17 = arith.muli %15, %16 : vector<8x128xi32>
    %c13_i32 = arith.constant 13 : i32
    %18 = vector.broadcast %c13_i32 : i32 to vector<8x128xi32>
    %19 = arith.shrui %17, %18 : vector<8x128xi32>
    %20 = arith.xori %17, %19 : vector<8x128xi32>
    %c-1028477387_i32 = arith.constant -1028477387 : i32
    %21 = vector.broadcast %c-1028477387_i32 : i32 to vector<8x128xi32>
    %22 = arith.muli %20, %21 : vector<8x128xi32>
    %c16_i32_0 = arith.constant 16 : i32
    %23 = vector.broadcast %c16_i32_0 : i32 to vector<8x128xi32>
    %24 = arith.shrui %22, %23 : vector<8x128xi32>
    %25 = arith.xori %22, %24 : vector<8x128xi32>
    %c0_i32 = arith.constant 0 : i32
    %26 = vector.broadcast %c0_i32 : i32 to vector<8x128xi32>
    %27 = arith.cmpi sge, %25, %26 : vector<8x128xi32>
    %c0_1 = arith.constant 0 : index
    %c0_2 = arith.constant 0 : index
    %28 = vector.load %arg2[%c0_1, %c0_2] : memref<8x128xf32, #tpu.memory_space<vmem>>, vector<8x128xf32>
    %cst = arith.constant 2.000000e+00 : f32
    %29 = vector.broadcast %cst : f32 to vector<8x128xf32>
    %30 = arith.mulf %28, %29 : vector<8x128xf32>
    %cst_3 = arith.constant 0.000000e+00 : f32
    %31 = vector.broadcast %cst_3 : f32 to vector<8x128xf32>
    %32 = arith.select %27, %30, %31 : vector<8x128xi1>, vector<8x128xf32>
    %c0_4 = arith.constant 0 : index
    %c0_5 = arith.constant 0 : index
    %33 = vector.load %arg3[%c0_4, %c0_5] : memref<8x128xf32, #tpu.memory_space<vmem>>, vector<8x128xf32>
    tpu.vector_store %arg3[%c0_4, %c0_5], %32 {strides = array<i32>} : memref<8x128xf32, #tpu.memory_space<vmem>>, vector<8x128xf32>,
    return
  }
  func.func @transform_0(%arg0: i32) -> i32 {
    %c0_i32 = arith.constant 0 : i32
    %c0_i32_0 = arith.constant 0 : i32
    return %c0_i32 : i32
  }
  func.func @transform_1(%arg0: i32) -> (i32, i32) {
    %c0_i32 = arith.constant 0 : i32
    %c0_i32_0 = arith.constant 0 : i32
    return %arg0, %c0_i32 : i32, i32
  }
  func.func @transform_2(%arg0: i32) -> (i32, i32) {
    %c0_i32 = arith.constant 0 : i32
    %c0_i32_0 = arith.constant 0 : i32
    return %arg0, %c0_i32 : i32, i32
  }
}

</mosaic_0001>

<llo_original>
// kernel: dropout_pallas.1
$region0: #{dropout_pallas.1}
  #allocation0 [shape = 'u32[]', space=smem, size = 0x4, offset = 0x4, fixed_abs, tag = 'smem constant byte address 0x4 - core index']
  #allocation1 [shape = 'u32[144,128]{1,0:T(1,128)}', space=vmem, size = 0x12000, scoped, tag = 'internal scratch']
  #allocation2 [shape = 's32[1]{0:T(128)S(6)}', space=smem, size = 0x200, scoped, tag = 'scoped memory for dropout_pallas.1']
  %s0 = inlined_call_operand.<no memory space> [shape: s32[1], index: 0, kind: input, shape index: {}]
  %s1 = inlined_call_operand.vmem [shape: f32[8,128], index: 1, kind: input, shape index: {}]
  %s2 = inlined_call_operand.vmem [shape: f32[8,128], index: 2, kind: output, shape index: {}]
  %s3 = sld [smem:[#allocation0]]
  $region18: #{dropout_pallas.1} parent=0
    _
  %s5 = ssub.s32 1, %s3
  %s6 = scalar_select 0, %s5, %s3
  %7 = sst [smem:[#allocation2]] %s0
  // Predicated region
  $region2: #{dropout_pallas.1} parent=0 // pred_check
    _
  $region3: #{dropout_pallas.1} parent=0 // pred_check_branch
    %9 = sbr.rel (0) target = $region5
  $region4: #{dropout_pallas.1} parent=0 // pred_region
    _
  $region5: #{dropout_pallas.1} parent=0 // pred_fallthru
    _
  // Predicated region
  $region6: #{dropout_pallas.1} parent=0 // pred_check
    _
  $region7: #{dropout_pallas.1} parent=0 // pred_check_branch
    %11 = sbr.rel (0) target = $region9
  $region8: #{dropout_pallas.1} parent=0 // pred_region
    _
  $region9: #{dropout_pallas.1} parent=0 // pred_fallthru
    _
  %v12 = vlaneseq
  %v13 = vshrl.u32 %v12, 7
  %v14 = vlaneseq
  %v15 = vand.u32 %v14, 127
  %s16 = smul.u32 0, 8
  %v17 = vstv %s16
  %v18 = vadd.s32 %v17, %v13
  %v19 = vmul.u32 %v18, 128
  %v20 = vadd.s32 %v19, %v15
  %s21 = sld [smem:[#allocation2]]
  %v22 = vstv %s21
  %v23 = vadd.s32 %v20, %v22
  %v24 = vmul.u32 %v23, 2654435769
  %v25 = vshrl.u32 %v24, 16
  %v26 = vxor.u32 %v24, %v25
  %v27 = vmul.u32 %v26, 2246822507
  %v28 = vshrl.u32 %v27, 13
  %v29 = vxor.u32 %v27, %v28
  %v30 = vmul.u32 %v29, 3266489909
  %v31 = vshrl.u32 %v30, 16
  %v32 = vxor.u32 %v30, %v31
  %vm33 = vcmp.ge.s32.totalorder %v32, 0
  %v34 = vld [vmem:[%s1] sm:$0xff]
  %v35 = vmul.f32 %v34, 2.0
  %v36 = vsel %vm33, %v35, 0.0
  %37 = vst [vmem:[%s2] sm:$0xff] %v36
  // Predicated region
  $region10: #{dropout_pallas.1} parent=0 // pred_check
    _
  $region11: #{dropout_pallas.1} parent=0 // pred_check_branch
    %39 = sbr.rel (0) target = $region13
  $region12: #{dropout_pallas.1} parent=0 // pred_region
    _
  $region13: #{dropout_pallas.1} parent=0 // pred_fallthru
    _
  // Predicated region
  $region14: #{dropout_pallas.1} parent=0 // pred_check
    _
  $region15: #{dropout_pallas.1} parent=0 // pred_check_branch
    %41 = sbr.rel (0) target = $region17
  $region16: #{dropout_pallas.1} parent=0 // pred_region
    _
  $region17: #{dropout_pallas.1} parent=0 // pred_fallthru
    _

</llo_original>
